<compile_context>
chip_gen: v6e
topology: v6e:2x2x1
jax: 0.10.0
libtpu: 0.0.40
codegen_flags: <defaults>
</compile_context>

<pallas_src>
import functools

import jax
import jax.numpy as jnp
from jax.experimental import pallas as pl
from jax.experimental.pallas import tpu as pltpu


LANE = 128            # logits padded to a lane-dense 128-wide output
_KERNEL_MUL = 2.0     # mmd.mmd_rbf_noaccelerate defaults
_KERNEL_NUM = 5


# --------------------------------------------------------------------------
# Fused kernel:
#   bottle : folded affine map  feat @ w_eff + b_eff   (== Linear(256,512);Linear(512,128))
#   clf    : Dropout(0.25) [identity in eval] -> Linear(bottleneck -> num_class, padded)
#   mmd    : mmd_rbf_noaccelerate(src_bottle, tgt_bottle)
# Inputs: source feats (B,256) and target feats (B,256) as separate VMEM refs.
# --------------------------------------------------------------------------
def _fused_kernel(src_ref, tgt_ref, w_ref, b_ref, wc_ref, bc_ref,
                  bottle_ref, logits_ref, mmd_ref):
    # stack source/target inside the kernel (no host-side concat / HBM materialization)
    feat = jnp.concatenate([src_ref[...], tgt_ref[...]], axis=0)        # (2B, 256) f32
    n = feat.shape[0]            # 2B
    b = n // 2

    # folded bottle: bf16 operands, f32 accumulation
    z = jnp.dot(feat.astype(jnp.bfloat16), w_ref[...],
                preferred_element_type=jnp.float32)
    z = z + b_ref[...]                                                  # (2B, bneck) f32
    bottle_ref[0] = z[:b]                                               # source bottle
    bottle_ref[1] = z[b:]                                               # target bottle

    # classifier (wc/bc zero-padded to LANE columns -> unmasked lane-dense store)
    logits = jnp.dot(z.astype(jnp.bfloat16), wc_ref[...],
                     preferred_element_type=jnp.float32)
    logits = logits + bc_ref[...]                                       # (2B, LANE)
    logits_ref[0] = logits[:b]
    logits_ref[1] = logits[b:]

    # ---- multi-kernel RBF MMD on the VMEM-resident bottle (f32) ---------------
    # single Gram matrix, contraction on dim 1 of both operands (z @ z.T, no .T)
    gram = jax.lax.dot_general(z, z, (((1,), (1,)), ((), ())),
                               preferred_element_type=jnp.float32)      # (2B, 2B)
    sq = jnp.sum(z * z, axis=-1, keepdims=True)                         # (2B, 1)
    dist = jnp.maximum(sq + sq.T - 2.0 * gram, 0.0)                     # ||zi - zj||^2 >= 0

    total_l2_sum = jnp.sum(dist)
    bandwidth = total_l2_sum / jnp.float32(n * n - n)
    bandwidth = bandwidth / (_KERNEL_MUL ** (_KERNEL_NUM // 2))
    bandwidth = jnp.maximum(bandwidth, jnp.float32(1e-12))              # NaN guard

    # exp once at the widest bandwidth; smaller bandwidths by repeated squaring
    # (exact for kernel_mul = 2.0: exp(-d/(bw*2^i)) = exp(-d/(bw*2^(i+1)))^2)
    widest = bandwidth * (_KERNEL_MUL ** (_KERNEL_NUM - 1))
    e = jnp.exp(dist * (-1.0 / widest))
    ksum = e
    for _ in range(_KERNEL_NUM - 1):
        e = e * e
        ksum = ksum + e

    # mean(K_XX + K_YY - K_XY - K_YX) == sum(K * sign) / b^2   (no sub-block slicing)
    rows = jax.lax.broadcasted_iota(jnp.int32, (n, n), 0)
    cols = jax.lax.broadcasted_iota(jnp.int32, (n, n), 1)
    same_side = (rows < b) == (cols < b)
    sgn = jnp.where(same_side, jnp.float32(1.0), jnp.float32(-1.0))
    loss = jnp.sum(ksum * sgn) / jnp.float32(b * b)
    mmd_ref[0] = loss                                                   # scalar -> SMEM


def _vmem_spec():
    return pl.BlockSpec(memory_space=pltpu.MemorySpace.VMEM)


def _nbytes(x):
    return int(x.size) * int(x.dtype.itemsize)


def fused_forward_call(src_feat, tgt_feat, w_eff, b_eff, wc_pad, bc_pad):
    b = src_feat.shape[0]
    n = 2 * b
    in_feat = w_eff.shape[0]
    bneck = w_eff.shape[1]
    lane = wc_pad.shape[1]

    out_shapes = (
        jax.ShapeDtypeStruct((2, b, bneck), jnp.float32),    # bottle [src; tgt]
        jax.ShapeDtypeStruct((2, b, lane), jnp.float32),     # padded logits [src; tgt]
        jax.ShapeDtypeStruct((1,), jnp.float32),             # mmd loss (SMEM scalar)
    )

    flops = (2 * n * in_feat * bneck          # folded bottle matmul
             + 2 * n * bneck * lane           # classifier matmul
             + 2 * n * n * bneck)             # Gram matrix
    bytes_accessed = (
        _nbytes(src_feat) + _nbytes(tgt_feat) + _nbytes(w_eff) + _nbytes(b_eff)
        + _nbytes(wc_pad) + _nbytes(bc_pad)
        + 2 * b * bneck * 4 + 2 * b * lane * 4 + 4)
    cost = pl.CostEstimate(flops=int(flops), transcendentals=int(n * n),
                           bytes_accessed=int(bytes_accessed))

    bottle, logits_pad, mmd = pl.pallas_call(
        _fused_kernel,
        out_shape=out_shapes,
        in_specs=[_vmem_spec() for _ in range(6)],
        out_specs=(_vmem_spec(), _vmem_spec(),
                   pl.BlockSpec(memory_space=pltpu.MemorySpace.SMEM)),
        cost_estimate=cost,
    )(src_feat, tgt_feat, w_eff, b_eff, wc_pad, bc_pad)
    return bottle, logits_pad, mmd


# --------------------------------------------------------------------------
# Parameter init (mirrors torch init in Transfer_Net.__init__):
#   bottle_layer[0], bottle_layer[1], classifier_layer[1]: weight ~ N(0, 0.01), bias = 0
# --------------------------------------------------------------------------
def init_params(key, in_feat=256, width=512, bottleneck_width=128, num_class=4):
    k1, k2, k3 = jax.random.split(key, 3)
    return {
        "w1": 0.01 * jax.random.normal(k1, (in_feat, width), jnp.float32),
        "b1": jnp.zeros((width,), jnp.float32),
        "w2": 0.01 * jax.random.normal(k2, (width, bottleneck_width), jnp.float32),
        "b2": jnp.zeros((bottleneck_width,), jnp.float32),
        "wc": 0.01 * jax.random.normal(k3, (bottleneck_width, num_class), jnp.float32),
        "bc": jnp.zeros((num_class,), jnp.float32),
    }


def fold_params(raw, num_class=4):
    """Precompute the kernel-side parameterization (once, outside the hot path).

    The torch bottle is Linear->Linear with no activation in between, so it folds
    exactly into a single affine map (fold done in f32, then weights cast to bf16).
    Classifier weight/bias are zero-padded to LANE output columns (lane-dense stores).
    """
    w_eff = (raw["w1"] @ raw["w2"]).astype(jnp.bfloat16)                   # (256, bneck)
    b_eff = (raw["b1"] @ raw["w2"] + raw["b2"]).reshape(1, -1)             # (1, bneck) f32
    bneck = raw["w2"].shape[1]
    wc_pad = jnp.zeros((bneck, LANE), jnp.float32).at[:, :num_class].set(raw["wc"])
    bc_pad = jnp.zeros((1, LANE), jnp.float32).at[:, :num_class].set(
        raw["bc"].reshape(1, -1))
    return {
        "w_eff": w_eff,
        "b_eff": b_eff,
        "wc": wc_pad.astype(jnp.bfloat16),
        "bc": bc_pad,
    }


# --------------------------------------------------------------------------
# Transfer_Net.forward (eval-mode / deterministic path):
#   returns (source_bottle, target_bottle, source_clf, t_label, transfer_loss)
# --------------------------------------------------------------------------
@functools.partial(jax.jit, static_argnames=("num_class",))
def transfer_net_forward(params, source_feat, target_feat, s_label, mu, num_class=4):
    del s_label                                   # cmmd branch is training-only
    p = params
    bottle, logits_pad, mmd = fused_forward_call(
        source_feat, target_feat, p["w_eff"], p["b_eff"], p["wc"], p["bc"])

    src_bottle = bottle[0]
    tgt_bottle = bottle[1]
    src_logits = logits_pad[0, :, :num_class]
    tgt_logits = logits_pad[1, :, :num_class]
    t_label = jnp.argmax(tgt_logits, axis=1)      # t_label.data.max(1)[1]

    mmd_loss = mmd[0]
    cmmd_loss = jnp.float32(0.0)                  # eval mode: cmmd branch skipped
    transfer_loss = (1.0 - mu) * cmmd_loss + mu * mmd_loss
    return src_bottle, tgt_bottle, src_logits, t_label, transfer_loss


if __name__ == "__main__":
    B, IN_FEAT, WIDTH, BOTTLENECK, NUM_CLASS = 8, 256, 512, 128, 4

    key = jax.random.PRNGKey(0)
    k_param, k_src, k_tgt, k_lab = jax.random.split(key, 4)

    raw_params = init_params(k_param, IN_FEAT, WIDTH, BOTTLENECK, NUM_CLASS)
    params = fold_params(raw_params, num_class=NUM_CLASS)

    # base_network outputs (256-d features) stand in for the external backbone.
    source_feat = jax.random.normal(k_src, (B, IN_FEAT), jnp.float32)
    target_feat = jax.random.normal(k_tgt, (B, IN_FEAT), jnp.float32)
    s_label = jax.random.randint(k_lab, (B,), 0, NUM_CLASS, jnp.int32)
    mu = jnp.float32(0.5)

    outs = transfer_net_forward(params, source_feat, target_feat, s_label, mu,
                                num_class=NUM_CLASS)
    outs = jax.block_until_ready(outs)

    src_b, tgt_b, src_clf, t_label, transfer_loss = outs
    assert src_b.shape == (B, BOTTLENECK)
    assert tgt_b.shape == (B, BOTTLENECK)
    assert src_clf.shape == (B, NUM_CLASS)
    assert t_label.shape == (B,)
    assert transfer_loss.shape == ()
    assert bool(jnp.isfinite(transfer_loss))
    assert bool(jnp.all(jnp.isfinite(src_b))) and bool(jnp.all(jnp.isfinite(src_clf)))

    print("KERNEL_OK")
</pallas_src>

<mosaic_0001>
module attributes {stable_mosaic.version = 11 : i64} {
  func.func @_fused_kernel(%arg0: memref<8x256xf32, #tpu.memory_space<vmem>>, %arg1: memref<8x256xf32, #tpu.memory_space<vmem>>, %arg2: memref<256x128xbf16, #tpu.memory_space<vmem>>, %arg3: memref<1x128xf32, #tpu.memory_space<vmem>>, %arg4: memref<128x128xbf16, #tpu.memory_space<vmem>>, %arg5: memref<1x128xf32, #tpu.memory_space<vmem>>, %arg6: memref<2x8x128xf32, #tpu.memory_space<vmem>>, %arg7: memref<2x8x128xf32, #tpu.memory_space<vmem>>, %arg8: memref<1xf32, #tpu.memory_space<smem>>) attributes {dimension_semantics = [], scalar_prefetch = 0 : i64, scratch_operands = 0 : i64, tpu.core_type = #tpu.core_type<tc>} {
    %c0 = arith.constant 0 : index
    %c0_0 = arith.constant 0 : index
    %0 = vector.load %arg0[%c0, %c0_0] : memref<8x256xf32, #tpu.memory_space<vmem>>, vector<8x256xf32>
    %c0_1 = arith.constant 0 : index
    %c0_2 = arith.constant 0 : index
    %1 = vector.load %arg1[%c0_1, %c0_2] : memref<8x256xf32, #tpu.memory_space<vmem>>, vector<8x256xf32>
    %2 = tpu.concatenate %0, %1 in 0 : vector<8x256xf32>, vector<8x256xf32> -> vector<16x256xf32>
    %3 = arith.truncf %2 : vector<16x256xf32> to vector<16x256xbf16>
    %c0_3 = arith.constant 0 : index
    %c0_4 = arith.constant 0 : index
    %4 = vector.load %arg2[%c0_3, %c0_4] : memref<256x128xbf16, #tpu.memory_space<vmem>>, vector<256x128xbf16>
    %cst = arith.constant dense<0.000000e+00> : vector<16x128xf32>
    %5 = tpu.matmul %3, %4, %cst {dimension_numbers = #tpu.dot_dimension_numbers<[1], [0], [0], [1], [0, 0, 1, 1], [], []>} : vector<16x256xbf16>, vector<256x128xbf16>, vector<16x128xf32> -> vector<16x128xf32>
    %c0_5 = arith.constant 0 : index
    %c0_6 = arith.constant 0 : index
    %6 = vector.load %arg3[%c0_5, %c0_6] : memref<1x128xf32, #tpu.memory_space<vmem>>, vector<1x128xf32>
    %7 = vector.broadcast %6 : vector<1x128xf32> to vector<16x128xf32>
    %8 = arith.addf %5, %7 : vector<16x128xf32>
    %9 = vector.extract_strided_slice %8 {offsets = [0, 0], sizes = [8, 128], strides = [1, 1]} : vector<16x128xf32> to vector<8x128xf32>
    %c0_7 = arith.constant 0 : index
    %c0_8 = arith.constant 0 : index
    %c0_9 = arith.constant 0 : index
    %10 = vector.load %arg6[%c0_7, %c0_8, %c0_9] : memref<2x8x128xf32, #tpu.memory_space<vmem>>, vector<1x8x128xf32>
    %11 = vector.shape_cast %10 : vector<1x8x128xf32> to vector<8x128xf32>
    %12 = vector.shape_cast %9 : vector<8x128xf32> to vector<1x8x128xf32>
    tpu.vector_store %arg6[%c0_7, %c0_8, %c0_9], %12 {strides = array<i32>} : memref<2x8x128xf32, #tpu.memory_space<vmem>>, vector<1x8x128xf32>,
    %13 = vector.extract_strided_slice %8 {offsets = [8, 0], sizes = [8, 128], strides = [1, 1]} : vector<16x128xf32> to vector<8x128xf32>
    %c1 = arith.constant 1 : index
    %c0_10 = arith.constant 0 : index
    %c0_11 = arith.constant 0 : index
    %14 = vector.load %arg6[%c1, %c0_10, %c0_11] : memref<2x8x128xf32, #tpu.memory_space<vmem>>, vector<1x8x128xf32>
    %15 = vector.shape_cast %14 : vector<1x8x128xf32> to vector<8x128xf32>
    %16 = vector.shape_cast %13 : vector<8x128xf32> to vector<1x8x128xf32>
    tpu.vector_store %arg6[%c1, %c0_10, %c0_11], %16 {strides = array<i32>} : memref<2x8x128xf32, #tpu.memory_space<vmem>>, vector<1x8x128xf32>,
    %17 = arith.truncf %8 : vector<16x128xf32> to vector<16x128xbf16>
    %c0_12 = arith.constant 0 : index
    %c0_13 = arith.constant 0 : index
    %18 = vector.load %arg4[%c0_12, %c0_13] : memref<128x128xbf16, #tpu.memory_space<vmem>>, vector<128x128xbf16>
    %cst_14 = arith.constant dense<0.000000e+00> : vector<16x128xf32>
    %19 = tpu.matmul %17, %18, %cst_14 {dimension_numbers = #tpu.dot_dimension_numbers<[1], [0], [0], [1], [0, 0, 1, 1], [], []>} : vector<16x128xbf16>, vector<128x128xbf16>, vector<16x128xf32> -> vector<16x128xf32>
    %c0_15 = arith.constant 0 : index
    %c0_16 = arith.constant 0 : index
    %20 = vector.load %arg5[%c0_15, %c0_16] : memref<1x128xf32, #tpu.memory_space<vmem>>, vector<1x128xf32>
    %21 = vector.broadcast %20 : vector<1x128xf32> to vector<16x128xf32>
    %22 = arith.addf %19, %21 : vector<16x128xf32>
    %23 = vector.extract_strided_slice %22 {offsets = [0, 0], sizes = [8, 128], strides = [1, 1]} : vector<16x128xf32> to vector<8x128xf32>
    %c0_17 = arith.constant 0 : index
    %c0_18 = arith.constant 0 : index
    %c0_19 = arith.constant 0 : index
    %24 = vector.load %arg7[%c0_17, %c0_18, %c0_19] : memref<2x8x128xf32, #tpu.memory_space<vmem>>, vector<1x8x128xf32>
    %25 = vector.shape_cast %24 : vector<1x8x128xf32> to vector<8x128xf32>
    %26 = vector.shape_cast %23 : vector<8x128xf32> to vector<1x8x128xf32>
    tpu.vector_store %arg7[%c0_17, %c0_18, %c0_19], %26 {strides = array<i32>} : memref<2x8x128xf32, #tpu.memory_space<vmem>>, vector<1x8x128xf32>,
    %27 = vector.extract_strided_slice %22 {offsets = [8, 0], sizes = [8, 128], strides = [1, 1]} : vector<16x128xf32> to vector<8x128xf32>
    %c1_20 = arith.constant 1 : index
    %c0_21 = arith.constant 0 : index
    %c0_22 = arith.constant 0 : index
    %28 = vector.load %arg7[%c1_20, %c0_21, %c0_22] : memref<2x8x128xf32, #tpu.memory_space<vmem>>, vector<1x8x128xf32>
    %29 = vector.shape_cast %28 : vector<1x8x128xf32> to vector<8x128xf32>
    %30 = vector.shape_cast %27 : vector<8x128xf32> to vector<1x8x128xf32>
    tpu.vector_store %arg7[%c1_20, %c0_21, %c0_22], %30 {strides = array<i32>} : memref<2x8x128xf32, #tpu.memory_space<vmem>>, vector<1x8x128xf32>,
    %cst_23 = arith.constant dense<0.000000e+00> : vector<16x16xf32>
    %31 = tpu.matmul %8, %8, %cst_23 {dimension_numbers = #tpu.dot_dimension_numbers<[1], [1], [0], [0], [0, 0, 1, 0], [], []>} : vector<16x128xf32>, vector<16x128xf32>, vector<16x16xf32> -> vector<16x16xf32>
    %32 = arith.mulf %8, %8 : vector<16x128xf32>
    %cst_24 = arith.constant dense<0.000000e+00> : vector<16xf32>
    %33 = vector.multi_reduction <add>, %32, %cst_24 [1] : vector<16x128xf32> to vector<16xf32>
    %34 = vector.shape_cast %33 : vector<16xf32> to vector<16x1xf32>
    %35 = tpu.transpose %34, [1, 0] : vector<16x1xf32> -> vector<1x16xf32>
    %36 = vector.broadcast %34 : vector<16x1xf32> to vector<16x16xf32>
    %37 = vector.broadcast %35 : vector<1x16xf32> to vector<16x16xf32>
    %38 = arith.addf %36, %37 : vector<16x16xf32>
    %cst_25 = arith.constant 2.000000e+00 : f32
    %39 = vector.broadcast %cst_25 : f32 to vector<16x16xf32>
    %40 = arith.mulf %39, %31 : vector<16x16xf32>
    %41 = arith.subf %38, %40 : vector<16x16xf32>
    %cst_26 = arith.constant 0.000000e+00 : f32
    %42 = vector.broadcast %cst_26 : f32 to vector<16x16xf32>
    %43 = arith.maximumf %41, %42 : vector<16x16xf32>
    %44 = vector.shape_cast %43 : vector<16x16xf32> to vector<1x16x16xf32>
    %cst_27 = arith.constant dense<0.000000e+00> : vector<1xf32>
    %45 = vector.multi_reduction <add>, %44, %cst_27 [1, 2] : vector<1x16x16xf32> to vector<1xf32>
    %46 = vector.shape_cast %45 : vector<1xf32> to vector<1x1x1xf32>
    %47 = vector.extract %46[0, 0, 0] : f32 from vector<1x1x1xf32>
    %cst_28 = arith.constant 2.400000e+02 : f32
    %48 = arith.divf %47, %cst_28 : f32
    %cst_29 = arith.constant 4.000000e+00 : f32
    %49 = arith.divf %48, %cst_29 : f32
    %cst_30 = arith.constant 9.99999996E-13 : f32
    %50 = arith.maximumf %49, %cst_30 : f32
    %cst_31 = arith.constant 1.600000e+01 : f32
    %51 = arith.mulf %50, %cst_31 : f32
    %cst_32 = arith.constant -1.000000e+00 : f32
    %52 = arith.divf %cst_32, %51 : f32
    %53 = vector.broadcast %52 : f32 to vector<16x16xf32>
    %54 = arith.mulf %43, %53 : vector<16x16xf32>
    %55 = math.exp %54 : vector<16x16xf32>
    %56 = arith.mulf %55, %55 : vector<16x16xf32>
    %57 = arith.addf %55, %56 : vector<16x16xf32>
    %58 = arith.mulf %56, %56 : vector<16x16xf32>
    %59 = arith.addf %57, %58 : vector<16x16xf32>
    %60 = arith.mulf %58, %58 : vector<16x16xf32>
    %61 = arith.addf %59, %60 : vector<16x16xf32>
    %62 = arith.mulf %60, %60 : vector<16x16xf32>
    %63 = arith.addf %61, %62 : vector<16x16xf32>
    %64 = tpu.iota {dimensions = array<i32: 0>} : vector<16x16xi32>
    %65 = tpu.iota {dimensions = array<i32: 1>} : vector<16x16xi32>
    %c8_i32 = arith.constant 8 : i32
    %66 = vector.broadcast %c8_i32 : i32 to vector<16x16xi32>
    %67 = arith.cmpi slt, %64, %66 : vector<16x16xi32>
    %c8_i32_33 = arith.constant 8 : i32
    %68 = vector.broadcast %c8_i32_33 : i32 to vector<16x16xi32>
    %69 = arith.cmpi slt, %65, %68 : vector<16x16xi32>
    %70 = arith.xori %67, %69 : vector<16x16xi1>
    %cst_34 = arith.constant dense<true> : vector<16x16xi1>
    %71 = arith.xori %70, %cst_34 : vector<16x16xi1>
    %cst_35 = arith.constant 1.000000e+00 : f32
    %cst_36 = arith.constant -1.000000e+00 : f32
    %72 = vector.broadcast %cst_35 : f32 to vector<16x16xf32>
    %73 = vector.broadcast %cst_36 : f32 to vector<16x16xf32>
    %74 = arith.select %71, %72, %73 : vector<16x16xi1>, vector<16x16xf32>
    %75 = arith.mulf %63, %74 : vector<16x16xf32>
    %76 = vector.shape_cast %75 : vector<16x16xf32> to vector<1x16x16xf32>
    %cst_37 = arith.constant dense<0.000000e+00> : vector<1xf32>
    %77 = vector.multi_reduction <add>, %76, %cst_37 [1, 2] : vector<1x16x16xf32> to vector<1xf32>
    %78 = vector.shape_cast %77 : vector<1xf32> to vector<1x1x1xf32>
    %79 = vector.extract %78[0, 0, 0] : f32 from vector<1x1x1xf32>
    %cst_38 = arith.constant 6.400000e+01 : f32
    %80 = arith.divf %79, %cst_38 : f32
    %c0_39 = arith.constant 0 : index
    %81 = memref.load %arg8[%c0_39] : memref<1xf32, #tpu.memory_space<smem>>
    memref.store %80, %arg8[%c0_39] : memref<1xf32, #tpu.memory_space<smem>>
    return
  }
}

</mosaic_0001>

<llo_original>
// kernel: transfer_net_forward.1
$region0: #{transfer_net_forward.1}
  #allocation0 [shape = 'u32[]', space=smem, size = 0x4, offset = 0x4, fixed_abs, tag = 'smem constant byte address 0x4 - core index']
  #allocation1 [shape = 'u32[144,128]{1,0:T(1,128)}', space=vmem, size = 0x12000, scoped, tag = 'internal scratch']
  %s0 = inlined_call_operand.hbm [shape: f32[8,256], index: 0, kind: input, shape index: {}]
  %s1 = inlined_call_operand.vmem [shape: f32[8,256], index: 1, kind: input, shape index: {}]
  %s2 = inlined_call_operand.hbm [shape: bf16[256,128], index: 2, kind: input, shape index: {}]
  %s3 = inlined_call_operand.vmem [shape: f32[1,128], index: 3, kind: input, shape index: {}]
  %s4 = inlined_call_operand.hbm [shape: bf16[128,128], index: 4, kind: input, shape index: {}]
  %s5 = inlined_call_operand.hbm [shape: f32[1,128], index: 5, kind: input, shape index: {}]
  %s6 = inlined_call_operand.vmem [shape: f32[2,8,128], index: 6, kind: output, shape index: {0}]
  %s7 = inlined_call_operand.vmem [shape: f32[2,8,128], index: 7, kind: output, shape index: {1}]
  %s8 = inlined_call_operand.hbm [shape: f32[1], index: 8, kind: output, shape index: {2}]
  %9 = xla_tuple %s6, %s7, %s8
  %s10 = sld [smem:[#allocation0]]
  $region66: #{transfer_net_forward.1} parent=0
    _
  %s12 = ssub.s32 1, %s10
  %s13 = scalar_select 0, %s12, %s10
  $region1: #{transfer_net_forward.1} parent=0
    #allocation2 [shape = 'u8[8192]{0}', space=vmem, size = 0x2000, scoped, tag = 'input window, operand 0, single buffered']
    #allocation3 [shape = 's32[1]{0}', space=sflag, size = 0x4, scoped, tag = 'scoped memory for transfer_net_forward.1']
    #allocation4 [shape = 's32[1]{0}', space=sflag, size = 0x4, scoped, tag = 'scoped memory for transfer_net_forward.1']
    #allocation5 [shape = 'u8[65536]{0}', space=vmem, size = 0x10000, scoped, tag = 'input window, operand 2, single buffered']
    #allocation6 [shape = 's32[1]{0}', space=sflag, size = 0x4, scoped, tag = 'scoped memory for transfer_net_forward.1']
    #allocation7 [shape = 'u8[32768]{0}', space=vmem, size = 0x8000, scoped, tag = 'input window, operand 4, single buffered']
    #allocation8 [shape = 'u8[512]{0}', space=vmem, size = 0x400, scoped, tag = 'input window, operand 5, single buffered']
    #allocation9 [shape = 's32[1]{0}', space=sflag, size = 0x4, scoped, tag = 'scoped memory for transfer_net_forward.1']
    #allocation10 [shape = 'u8[512]{0}', space=smem, size = 0x200, scoped, tag = 'output window, operand 2, single buffered']
    %14 = vsyncpa [#allocation3], 0
    %15 = vsyncpa [#allocation6], 0
    %16 = vsyncpa [#allocation9], 0
    %17 = vsyncpa [#allocation4], 0
    // Predicated region
    $region2: #{transfer_net_forward.1} parent=1 // pred_check
      _
    $region3: #{transfer_net_forward.1} parent=1 // pred_check_branch
      %19 = sbr.rel (0) target = $region5
    $region4: #{transfer_net_forward.1} parent=1 // pred_region
      %s21 = ssub.s32 256, 256
      %22 = vsyncadd [#allocation3], %s21
      %s24 = sshll.u32 [#allocation2], 4
      %s25 = int_to_ptr.vmem [resolvable:$true] %s24
      %27 = dma.hbm_to_vmem [thread:$0]  %s0, 256, %s25, [#allocation3]
    $region5: #{transfer_net_forward.1} parent=1 // pred_fallthru
      _
    // Predicated region
    $region6: #{transfer_net_forward.1} parent=1 // pred_check
      _
    $region7: #{transfer_net_forward.1} parent=1 // pred_check_branch
      %29 = sbr.rel (0) target = $region9
    $region8: #{transfer_net_forward.1} parent=1 // pred_region
      _
    $region9: #{transfer_net_forward.1} parent=1 // pred_fallthru
      _
    // Predicated region
    $region10: #{transfer_net_forward.1} parent=1 // pred_check
      _
    $region11: #{transfer_net_forward.1} parent=1 // pred_check_branch
      %31 = sbr.rel (0) target = $region13
    $region12: #{transfer_net_forward.1} parent=1 // pred_region
      %s33 = ssub.s32 2048, 2048
      %34 = vsyncadd [#allocation6], %s33
      %s35 = sshll.u32 [#allocation5], 4
      %s36 = int_to_ptr.vmem [resolvable:$true] %s35
      %41 = dma.hbm_to_vmem [thread:$0]  %s2, 2048, %s36, [#allocation6], 64, 64, 4
    $region13: #{transfer_net_forward.1} parent=1 // pred_fallthru
      _
    // Predicated region
    $region14: #{transfer_net_forward.1} parent=1 // pred_check
      _
    $region15: #{transfer_net_forward.1} parent=1 // pred_check_branch
      %43 = sbr.rel (0) target = $region17
    $region16: #{transfer_net_forward.1} parent=1 // pred_region
      _
    $region17: #{transfer_net_forward.1} parent=1 // pred_fallthru
      _
    // Predicated region
    $region18: #{transfer_net_forward.1} parent=1 // pred_check
      _
    $region19: #{transfer_net_forward.1} parent=1 // pred_check_branch
      %45 = sbr.rel (0) target = $region21
    $region20: #{transfer_net_forward.1} parent=1 // pred_region
      %s47 = ssub.s32 1024, 1024
      %48 = vsyncadd [#allocation6], %s47
      %s49 = sshll.u32 [#allocation7], 4
      %s50 = int_to_ptr.vmem [resolvable:$true] %s49
      %55 = dma.hbm_to_vmem [thread:$0]  %s4, 1024, %s50, [#allocation6], 64, 64, 4
    $region21: #{transfer_net_forward.1} parent=1 // pred_fallthru
      _
    // Predicated region
    $region22: #{transfer_net_forward.1} parent=1 // pred_check
      _
    $region23: #{transfer_net_forward.1} parent=1 // pred_check_branch
      %57 = sbr.rel (0) target = $region25
    $region24: #{transfer_net_forward.1} parent=1 // pred_region
      %s59 = ssub.s32 16, 16
      %60 = vsyncadd [#allocation9], %s59
      %s62 = sshll.u32 [#allocation8], 4
      %s63 = int_to_ptr.vmem [resolvable:$true] %s62
      %65 = dma.hbm_to_vmem [thread:$0]  %s5, 16, %s63, [#allocation9]
    $region25: #{transfer_net_forward.1} parent=1 // pred_fallthru
      _
    // Predicated region
    $region26: #{transfer_net_forward.1} parent=1 // pred_check
      _
    $region27: #{transfer_net_forward.1} parent=1 // pred_check_branch
      %67 = sbr.rel (0) target = $region29
    $region28: #{transfer_net_forward.1} parent=1 // pred_region
      %68 = dma.done [#allocation3], 256
    $region29: #{transfer_net_forward.1} parent=1 // pred_fallthru
      _
    // Predicated region
    $region30: #{transfer_net_forward.1} parent=1 // pred_check
      _
    $region31: #{transfer_net_forward.1} parent=1 // pred_check_branch
      %70 = sbr.rel (0) target = $region33
    $region32: #{transfer_net_forward.1} parent=1 // pred_region
      %71 = dma.done [#allocation6], 2048
    $region33: #{transfer_net_forward.1} parent=1 // pred_fallthru
      _
    // Predicated region
    $region34: #{transfer_net_forward.1} parent=1 // pred_check
      _
    $region35: #{transfer_net_forward.1} parent=1 // pred_check_branch
      %73 = sbr.rel (0) target = $region37
    $region36: #{transfer_net_forward.1} parent=1 // pred_region
      %74 = dma.done [#allocation6], 1024
    $region37: #{transfer_net_forward.1} parent=1 // pred_fallthru
      _
    // Predicated region
    $region38: #{transfer_net_forward.1} parent=1 // pred_check
      _
    $region39: #{transfer_net_forward.1} parent=1 // pred_check_branch
      %76 = sbr.rel (0) target = $region41
    $region40: #{transfer_net_forward.1} parent=1 // pred_region
      %77 = dma.done [#allocation9], 16
    $region41: #{transfer_net_forward.1} parent=1 // pred_fallthru
      _
    %v79 = vld [vmem:[#allocation2] sm:$0xff]
    %v80 = vld [vmem:[#allocation2 + $0x8] sm:$0xff]
    %v81 = vld [vmem:[%s1] sm:$0xff]
    %v82 = vld [vmem:[%s1 + $0x8] sm:$0xff]
    %v83 = vpack.c.bf16 %v81, %v79
    %v84 = vpack.c.bf16 %v82, %v80
    %v85 = vld [vmem:[#allocation5] sm:$0xf]
    %v86 = vld [vmem:[#allocation5 + $0x4] sm:$0xf]
    %v87 = vld [vmem:[#allocation5 + $0x8] sm:$0xf]
    %v88 = vld [vmem:[#allocation5 + $0xc] sm:$0xf]
    %v89 = vld [vmem:[#allocation5 + $0x10] sm:$0xf]
    %v90 = vld [vmem:[#allocation5 + $0x14] sm:$0xf]
    %v91 = vld [vmem:[#allocation5 + $0x18] sm:$0xf]
    %v92 = vld [vmem:[#allocation5 + $0x1c] sm:$0xf]
    %v93 = vld [vmem:[#allocation5 + $0x20] sm:$0xf]
    %v94 = vld [vmem:[#allocation5 + $0x24] sm:$0xf]
    %v95 = vld [vmem:[#allocation5 + $0x28] sm:$0xf]
    %v96 = vld [vmem:[#allocation5 + $0x2c] sm:$0xf]
    %v97 = vld [vmem:[#allocation5 + $0x30] sm:$0xf]
    %v98 = vld [vmem:[#allocation5 + $0x34] sm:$0xf]
    %v99 = vld [vmem:[#allocation5 + $0x38] sm:$0xf]
    %v100 = vld [vmem:[#allocation5 + $0x3c] sm:$0xf]
    %v101 = vld [vmem:[#allocation5 + $0x40] sm:$0xf]
    %v102 = vld [vmem:[#allocation5 + $0x44] sm:$0xf]
    %v103 = vld [vmem:[#allocation5 + $0x48] sm:$0xf]
    %v104 = vld [vmem:[#allocation5 + $0x4c] sm:$0xf]
    %v105 = vld [vmem:[#allocation5 + $0x50] sm:$0xf]
    %v106 = vld [vmem:[#allocation5 + $0x54] sm:$0xf]
    %v107 = vld [vmem:[#allocation5 + $0x58] sm:$0xf]
    %v108 = vld [vmem:[#allocation5 + $0x5c] sm:$0xf]
    %v109 = vld [vmem:[#allocation5 + $0x60] sm:$0xf]
    %v110 = vld [vmem:[#allocation5 + $0x64] sm:$0xf]
    %v111 = vld [vmem:[#allocation5 + $0x68] sm:$0xf]
    %v112 = vld [vmem:[#allocation5 + $0x6c] sm:$0xf]
    %v113 = vld [vmem:[#allocation5 + $0x70] sm:$0xf]
    %v114 = vld [vmem:[#allocation5 + $0x74] sm:$0xf]
    %v115 = vld [vmem:[#allocation5 + $0x78] sm:$0xf]
    %v116 = vld [vmem:[#allocation5 + $0x7c] sm:$0xf]
    %v117 = vld [vmem:[%s3] sm:$0x1]
    %v119 = vlaneseq
    %v120 = vshrl.u32 %v119, 7
    %v121 = vsub.s32 0, %v120
    %v122 = vrot.slane %v117, %v121
    %v156 = vunpack.c.l.b16 %v85
    %v157 = vunpack.c.l.b16 %v86
    %v158 = vunpack.c.l.b16 %v87
    %v159 = vunpack.c.l.b16 %v88
    %v160 = vunpack.c.l.b16 %v89
    %v161 = vunpack.c.l.b16 %v90
    %v162 = vunpack.c.l.b16 %v91
    %v163 = vunpack.c.l.b16 %v92
    %v164 = vunpack.c.l.b16 %v93
    %v165 = vunpack.c.l.b16 %v94
    %v166 = vunpack.c.l.b16 %v95
    %v167 = vunpack.c.l.b16 %v96
    %v168 = vunpack.c.l.b16 %v97
    %v169 = vunpack.c.l.b16 %v98
    %v170 = vunpack.c.l.b16 %v99
    %v171 = vunpack.c.l.b16 %v100
    %v172 = vunpack.c.l.b16 %v101
    %v173 = vunpack.c.l.b16 %v102
    %v174 = vunpack.c.l.b16 %v103
    %v175 = vunpack.c.l.b16 %v104
    %v176 = vunpack.c.l.b16 %v105
    %v177 = vunpack.c.l.b16 %v106
    %v178 = vunpack.c.l.b16 %v107
    %v179 = vunpack.c.l.b16 %v108
    %v180 = vunpack.c.l.b16 %v109
    %v181 = vunpack.c.l.b16 %v110
    %v182 = vunpack.c.l.b16 %v111
    %v183 = vunpack.c.l.b16 %v112
    %v184 = vunpack.c.l.b16 %v113
    %v185 = vunpack.c.l.b16 %v114
    %v186 = vunpack.c.l.b16 %v115
    %v187 = vunpack.c.l.b16 %v116
    %v188 = vpack.c.b16 %v157, %v156
    %v189 = vpack.c.b16 %v159, %v158
    %v190 = vpack.c.b16 %v161, %v160
    %v191 = vpack.c.b16 %v163, %v162
    %v192 = vpack.c.b16 %v165, %v164
    %v193 = vpack.c.b16 %v167, %v166
    %v194 = vpack.c.b16 %v169, %v168
    %v195 = vpack.c.b16 %v171, %v170
    %v196 = vpack.c.b16 %v173, %v172
    %v197 = vpack.c.b16 %v175, %v174
    %v198 = vpack.c.b16 %v177, %v176
    %v199 = vpack.c.b16 %v179, %v178
    %v200 = vpack.c.b16 %v181, %v180
    %v201 = vpack.c.b16 %v183, %v182
    %v202 = vpack.c.b16 %v185, %v184
    %v203 = vpack.c.b16 %v187, %v186
    %220 = vmatprep.subr.bf16.mxu0 0
    %221 = vmatpush1.bf16.msra.mxu0 %v195
    %222 = vmatprep.subr.bf16.mxu0 0
    %223 = vmatpush1.bf16.msra.mxu0 %v194
    %224 = vmatprep.subr.bf16.mxu0 0
    %225 = vmatpush1.bf16.msra.mxu0 %v193
    %226 = vmatprep.subr.bf16.mxu0 0
    %227 = vmatpush1.bf16.msra.mxu0 %v192
    %228 = vmatprep.subr.bf16.mxu0 0
    %229 = vmatpush1.bf16.msra.mxu0 %v191
    %230 = vmatprep.subr.bf16.mxu0 0
    %231 = vmatpush1.bf16.msra.mxu0 %v190
    %232 = vmatprep.subr.bf16.mxu0 0
    %233 = vmatpush1.bf16.msra.mxu0 %v189
    %234 = vmatprep.subr.bf16.mxu0 0
    %235 = vmatpush1.bf16.msra.mxu0 %v188
    %236 = vmatprep.subr.bf16.mxu0 0
    %237 = vmatpush2.bf16.msra.mxu0 %v203
    %238 = vmatprep.subr.bf16.mxu0 0
    %239 = vmatpush2.bf16.msra.mxu0 %v202
    %240 = vmatprep.subr.bf16.mxu0 0
    %241 = vmatpush2.bf16.msra.mxu0 %v201
    %242 = vmatprep.subr.bf16.mxu0 0
    %243 = vmatpush2.bf16.msra.mxu0 %v200
    %244 = vmatprep.subr.bf16.mxu0 0
    %245 = vmatpush2.bf16.msra.mxu0 %v199
    %246 = vmatprep.subr.bf16.mxu0 0
    %247 = vmatpush2.bf16.msra.mxu0 %v198
    %248 = vmatprep.subr.bf16.mxu0 0
    %249 = vmatpush2.bf16.msra.mxu0 %v197
    %250 = vmatprep.subr.bf16.mxu0 0
    %251 = vmatpush2.bf16.msra.mxu0 %v196
    %252 = vmatprep.mubr.bf16.mxu0 %v84
    %253 = vmatmul.mubr.bf16.gmra.mxu0 %v83
    %v254 = vpop.f32.mrf.mxu0
    %v255 = vadd.f32 %v122, %v254
    %v256 = vpop.f32.mrf.mxu0
    %v257 = vpop.f32.mrf.mxu0
    %v258 = vadd.f32 %v122, %v257
    %v259 = vpop.f32.mrf.mxu0
    %260 = vdwg.mxu0
    %261 = vst [vmem:[%s6] sm:$0xff] %v255
    %s262 = scalar_lea.vmem %s6, 8
    %263 = vst [vmem:[%s262] sm:$0xff] %v258
    %v264 = vpack.c.bf16 %v258, %v255
    %v265 = vld [vmem:[#allocation7] sm:$0xf]
    %v266 = vld [vmem:[#allocation7 + $0x4] sm:$0xf]
    %v267 = vld [vmem:[#allocation7 + $0x8] sm:$0xf]
    %v268 = vld [vmem:[#allocation7 + $0xc] sm:$0xf]
    %v269 = vld [vmem:[#allocation7 + $0x10] sm:$0xf]
    %v270 = vld [vmem:[#allocation7 + $0x14] sm:$0xf]
    %v271 = vld [vmem:[#allocation7 + $0x18] sm:$0xf]
    %v272 = vld [vmem:[#allocation7 + $0x1c] sm:$0xf]
    %v273 = vld [vmem:[#allocation7 + $0x20] sm:$0xf]
    %v274 = vld [vmem:[#allocation7 + $0x24] sm:$0xf]
    %v275 = vld [vmem:[#allocation7 + $0x28] sm:$0xf]
    %v276 = vld [vmem:[#allocation7 + $0x2c] sm:$0xf]
    %v277 = vld [vmem:[#allocation7 + $0x30] sm:$0xf]
    %v278 = vld [vmem:[#allocation7 + $0x34] sm:$0xf]
    %v279 = vld [vmem:[#allocation7 + $0x38] sm:$0xf]
    %v280 = vld [vmem:[#allocation7 + $0x3c] sm:$0xf]
    %v281 = vld [vmem:[#allocation8] sm:$0x1]
    %v283 = vlaneseq
    %v284 = vshrl.u32 %v283, 7
    %v285 = vsub.s32 0, %v284
    %v286 = vrot.slane %v281, %v285
    %v304 = vunpack.c.l.b16 %v265
    %v305 = vunpack.c.l.b16 %v266
    %v306 = vunpack.c.l.b16 %v267
    %v307 = vunpack.c.l.b16 %v268
    %v308 = vunpack.c.l.b16 %v269
    %v309 = vunpack.c.l.b16 %v270
    %v310 = vunpack.c.l.b16 %v271
    %v311 = vunpack.c.l.b16 %v272
    %v312 = vunpack.c.l.b16 %v273
    %v313 = vunpack.c.l.b16 %v274
    %v314 = vunpack.c.l.b16 %v275
    %v315 = vunpack.c.l.b16 %v276
    %v316 = vunpack.c.l.b16 %v277
    %v317 = vunpack.c.l.b16 %v278
    %v318 = vunpack.c.l.b16 %v279
    %v319 = vunpack.c.l.b16 %v280
    %v320 = vpack.c.b16 %v305, %v304
    %v321 = vpack.c.b16 %v307, %v306
    %v322 = vpack.c.b16 %v309, %v308
    %v323 = vpack.c.b16 %v311, %v310
    %v324 = vpack.c.b16 %v313, %v312
    %v325 = vpack.c.b16 %v315, %v314
    %v326 = vpack.c.b16 %v317, %v316
    %v327 = vpack.c.b16 %v319, %v318
    %336 = vmatprep.subr.bf16.mxu0 0
    %337 = vmatpush1.bf16.msra.mxu0 %v327
    %338 = vmatprep.subr.bf16.mxu0 0
    %339 = vmatpush1.bf16.msra.mxu0 %v326
    %340 = vmatprep.subr.bf16.mxu0 0
    %341 = vmatpush1.bf16.msra.mxu0 %v325
    %342 = vmatprep.subr.bf16.mxu0 0
    %343 = vmatpush1.bf16.msra.mxu0 %v324
    %344 = vmatprep.subr.bf16.mxu0 0
    %345 = vmatpush1.bf16.msra.mxu0 %v323
    %346 = vmatprep.subr.bf16.mxu0 0
    %347 = vmatpush1.bf16.msra.mxu0 %v322
    %348 = vmatprep.subr.bf16.mxu0 0
    %349 = vmatpush1.bf16.msra.mxu0 %v321
    %350 = vmatprep.subr.bf16.mxu0 0
    %351 = vmatpush1.bf16.msra.mxu0 %v320
    %352 = vmatprep.subr.bf16.mxu0 0
    %353 = vmatpush2.bf16.msra.mxu0 0
    %354 = vmatprep.subr.bf16.mxu0 0
    %355 = vmatpush2.bf16.msra.mxu0 0
    %356 = vmatprep.subr.bf16.mxu0 0
    %357 = vmatpush2.bf16.msra.mxu0 0
    %358 = vmatprep.subr.bf16.mxu0 0
    %359 = vmatpush2.bf16.msra.mxu0 0
    %360 = vmatprep.subr.bf16.mxu0 0
    %361 = vmatpush2.bf16.msra.mxu0 0
    %362 = vmatprep.subr.bf16.mxu0 0
    %363 = vmatpush2.bf16.msra.mxu0 0
    %364 = vmatprep.subr.bf16.mxu0 0
    %365 = vmatpush2.bf16.msra.mxu0 0
    %366 = vmatprep.subr.bf16.mxu0 0
    %367 = vmatpush2.bf16.msra.mxu0 0
    %368 = vmatprep.mubr.bf16.mxu0 0
    %369 = vmatmul.mubr.bf16.gmra.mxu0 %v264
    %v370 = vpop.f32.mrf.mxu0
    %v371 = vadd.f32 %v286, %v370
    %v372 = vpop.f32.mrf.mxu0
    %v373 = vpop.f32.mrf.mxu0
    %v374 = vadd.f32 %v286, %v373
    %v375 = vpop.f32.mrf.mxu0
    %376 = vdwg.mxu0
    %377 = vst [vmem:[%s7] sm:$0xff] %v371
    %s378 = scalar_lea.vmem %s7, 8
    %379 = vst [vmem:[%s378] sm:$0xff] %v374
    %380 = vmatprep.subr.mxu0 0.0
    %381 = vmatpush1.xpose.msra.mxu0 0.0
    %382 = vmatprep.subr.mxu0 0.0
    %383 = vmatpush1.xpose.msra.mxu0 0.0
    %384 = vmatprep.subr.mxu0 0.0
    %385 = vmatpush1.xpose.msra.mxu0 0.0
    %386 = vmatprep.subr.mxu0 0.0
    %387 = vmatpush1.xpose.msra.mxu0 0.0
    %388 = vmatprep.subr.mxu0 0.0
    %389 = vmatpush1.xpose.msra.mxu0 0.0
    %390 = vmatprep.subr.mxu0 0.0
    %391 = vmatpush1.xpose.msra.mxu0 0.0
    %392 = vmatprep.subr.mxu0 0.0
    %393 = vmatpush1.xpose.msra.mxu0 0.0
    %394 = vmatprep.subr.mxu0 0.0
    %395 = vmatpush1.xpose.msra.mxu0 0.0
    %396 = vmatprep.subr.mxu0 0.0
    %397 = vmatpush1.xpose.msra.mxu0 0.0
    %398 = vmatprep.subr.mxu0 0.0
    %399 = vmatpush1.xpose.msra.mxu0 0.0
    %400 = vmatprep.subr.mxu0 0.0
    %401 = vmatpush1.xpose.msra.mxu0 0.0
    %402 = vmatprep.subr.mxu0 0.0
    %403 = vmatpush1.xpose.msra.mxu0 0.0
    %404 = vmatprep.subr.mxu0 0.0
    %405 = vmatpush1.xpose.msra.mxu0 0.0
    %406 = vmatprep.subr.mxu0 0.0
    %407 = vmatpush1.xpose.msra.mxu0 0.0
    %408 = vmatprep.subr.mxu0 0.0
    %409 = vmatpush1.xpose.msra.mxu0 %v258
    %410 = vmatprep.subr.mxu0 0.0
    %411 = vmatpush1.xpose.msra.mxu0 %v255
    %412 = vmatprep.subr.mxu0 0.0
    %413 = vmatpush2.xpose.msra.mxu0 0.0
    %414 = vmatprep.subr.mxu0 0.0
    %415 = vmatpush2.xpose.msra.mxu0 0.0
    %416 = vmatprep.subr.mxu0 0.0
    %417 = vmatpush2.xpose.msra.mxu0 0.0
    %418 = vmatprep.subr.mxu0 0.0
    %419 = vmatpush2.xpose.msra.mxu0 0.0
    %420 = vmatprep.subr.mxu0 0.0
    %421 = vmatpush2.xpose.msra.mxu0 0.0
    %422 = vmatprep.subr.mxu0 0.0
    %423 = vmatpush2.xpose.msra.mxu0 0.0
    %424 = vmatprep.subr.mxu0 0.0
    %425 = vmatpush2.xpose.msra.mxu0 0.0
    %426 = vmatprep.subr.mxu0 0.0
    %427 = vmatpush2.xpose.msra.mxu0 0.0
    %428 = vmatprep.subr.mxu0 0.0
    %429 = vmatpush2.xpose.msra.mxu0 0.0
    %430 = vmatprep.subr.mxu0 0.0
    %431 = vmatpush2.xpose.msra.mxu0 0.0
    %432 = vmatprep.subr.mxu0 0.0
    %433 = vmatpush2.xpose.msra.mxu0 0.0
    %434 = vmatprep.subr.mxu0 0.0
    %435 = vmatpush2.xpose.msra.mxu0 0.0
    %436 = vmatprep.subr.mxu0 0.0
    %437 = vmatpush2.xpose.msra.mxu0 0.0
    %438 = vmatprep.subr.mxu0 0.0
    %439 = vmatpush2.xpose.msra.mxu0 0.0
    %440 = vmatprep.subr.mxu0 0.0
    %441 = vmatpush2.xpose.msra.mxu0 0.0
    %442 = vmatprep.subr.mxu0 0.0
    %443 = vmatpush2.xpose.msra.mxu0 0.0
    %444 = vmatprep.mubr.f32.mxu0 0.0
    %445 = vmatmul.mubr.f32.gmra.mxu0 %v255
    %v446 = vpop.f32.mrf.mxu0
    %v447 = vadd.f32 0.0, %v446
    %v448 = vpop.f32.mrf.mxu0
    %449 = vmatprep.mubr.f32.mxu0 0.0
    %450 = vmatmul.mubr.f32.gmra.mxu0 %v258
    %v451 = vpop.f32.mrf.mxu0
    %v452 = vadd.f32 0.0, %v451
    %v453 = vpop.f32.mrf.mxu0
    %454 = vdwg.mxu0
    %v455 = vmul.f32 %v255, %v255
    %v456 = vmul.f32 %v258, %v258
    %457 = vadd.xlane.f32.xlu0 %v455
    %v458 = vpop.xlane.xlu0 %457
    %459 = vadd.xlane.f32.xlu0 %v456
    %v460 = vpop.xlane.xlu0 %459
    %461 = vxpose.xlu0.b32.start [1/16] %v458, 128
    %462 = vxpose.xlu0.b32.cont [2/16] %v460, 128
    %463 = vxpose.xlu0.b32.cont [3/16] 0.0, 128
    %464 = vxpose.xlu0.b32.cont [4/16] 0.0, 128
    %465 = vxpose.xlu0.b32.cont [5/16] 0.0, 128
    %466 = vxpose.xlu0.b32.cont [6/16] 0.0, 128
    %467 = vxpose.xlu0.b32.cont [7/16] 0.0, 128
    %468 = vxpose.xlu0.b32.cont [8/16] 0.0, 128
    %469 = vxpose.xlu0.b32.cont [9/16] 0.0, 128
    %470 = vxpose.xlu0.b32.cont [10/16] 0.0, 128
    %471 = vxpose.xlu0.b32.cont [11/16] 0.0, 128
    %472 = vxpose.xlu0.b32.cont [12/16] 0.0, 128
    %473 = vxpose.xlu0.b32.cont [13/16] 0.0, 128
    %474 = vxpose.xlu0.b32.cont [14/16] 0.0, 128
    %475 = vxpose.xlu0.b32.cont [15/16] 0.0, 128
    %476 = vxpose.xlu0.b32.end [16/16] 0.0, 128
    %v477 = vpop.trf.xlu0
    %v478 = vpop.trf.xlu0
    %v479 = vpop.trf.xlu0
    %v480 = vpop.trf.xlu0
    %v481 = vpop.trf.xlu0
    %v482 = vpop.trf.xlu0
    %v483 = vpop.trf.xlu0
    %v484 = vpop.trf.xlu0
    %v485 = vpop.trf.xlu0
    %v486 = vpop.trf.xlu0
    %v487 = vpop.trf.xlu0
    %v488 = vpop.trf.xlu0
    %v489 = vpop.trf.xlu0
    %v490 = vpop.trf.xlu0
    %v491 = vpop.trf.xlu0
    %v492 = vpop.trf.xlu0
    %v493 = vlaneseq
    %v494 = vshrl.u32 %v493, 7
    %v495 = vsub.s32 0, %v494
    %v496 = vrot.slane %v477, %v495
    %v497 = vadd.f32 %v458, %v496
    %v498 = vadd.f32 %v460, %v496
    %v499 = vmul.f32 %v447, 2.0
    %v500 = vmul.f32 %v452, 2.0
    %v501 = vsub.f32 %v497, %v499
    %v502 = vsub.f32 %v498, %v500
    %v503 = vmax.f32 %v501, 0.0
    %v504 = vmax.f32 %v502, 0.0
    %vm505 = vcmask 130048
    %v506 = vsel %vm505, %v503, 0.0
    %v507 = vsel %vm505, %v504, 0.0
    %v508 = vadd.f32 %v506, %v507
    %509 = vadd.xlane.f32.xlu0 %v508
    %v510 = vpop.xlane.xlu0 %509
    %v511 = vrot.slane %v510, 4
    %v512 = vadd.f32 %v510, %v511
    %v513 = vrot.slane %v512, 2
    %v514 = vadd.f32 %v512, %v513
    %v515 = vrot.slane %v514, 1
    %v516 = vadd.f32 %v514, %v515
    %s517 = vtos %v516
    %v518 = vrcp.pop 240.0
    %s519 = vtos %v518
    %s520 = smul.f32 %s517, %s519
    %v521 = vrcp.pop 4.0
    %s522 = vtos %v521
    %s523 = smul.f32 %s520, %s522
    %s524 = smax.f32 %s523, 1e-12
    %s525 = smul.f32 %s524, 16.0
    %v526 = vstv %s525
    %v527 = vrcp.pop %v526
    %s528 = vtos %v527
    %s529 = smul.f32 -1.0, %s528
    %v530 = vstv %s529
    %v531 = vmul.f32 %v503, %v530
    %v532 = vmul.f32 %v504, %v530
    %v533 = vmul.f32 %v531, 1.442695
    %v534 = vpow.pop %v533
    %v535 = vmul.f32 %v532, 1.442695
    %v536 = vpow.pop %v535
    %v537 = vmul.f32 %v534, %v534
    %v538 = vmul.f32 %v536, %v536
    %v539 = vadd.f32 %v534, %v537
    %v540 = vadd.f32 %v536, %v538
    %v541 = vmul.f32 %v537, %v537
    %v542 = vmul.f32 %v538, %v538
    %v543 = vadd.f32 %v539, %v541
    %v544 = vadd.f32 %v540, %v542
    %v545 = vmul.f32 %v541, %v541
    %v546 = vmul.f32 %v542, %v542
    %v547 = vadd.f32 %v543, %v545
    %v548 = vadd.f32 %v544, %v546
    %v549 = vmul.f32 %v545, %v545
    %v550 = vmul.f32 %v546, %v546
    %v551 = vadd.f32 %v547, %v549
    %v552 = vadd.f32 %v548, %v550
    %v553 = vlaneseq
    %v554 = vshrl.u32 %v553, 7
    %v555 = vadd.s32 %v554, 8
    %v556 = vlaneseq
    %v557 = vand.u32 %v556, 127
    %vm558 = vcmp.lt.s32.totalorder %v554, 8
    %vm559 = vcmp.lt.s32.totalorder %v555, 8
    %vm560 = vcmp.lt.s32.totalorder %v557, 8
    %vm561 = vmxor %vm558, %vm560
    %vm562 = vmxor %vm559, %vm560
    %vm563 = vmxor %vm561, 1
    %vm564 = vmxor %vm562, 1
    %v565 = vsel %vm563, 1.0, -1.0
    %v566 = vsel %vm564, 1.0, -1.0
    %v567 = vmul.f32 %v551, %v565
    %v568 = vmul.f32 %v552, %v566
    %v569 = vsel %vm505, %v567, 0.0
    %v570 = vsel %vm505, %v568, 0.0
    %v571 = vadd.f32 %v569, %v570
    %572 = vadd.xlane.f32.xlu0 %v571
    %v573 = vpop.xlane.xlu0 %572
    %v574 = vrot.slane %v573, 4
    %v575 = vadd.f32 %v573, %v574
    %v576 = vrot.slane %v575, 2
    %v577 = vadd.f32 %v575, %v576
    %v578 = vrot.slane %v577, 1
    %v579 = vadd.f32 %v577, %v578
    %s580 = vtos %v579
    %v581 = vrcp.pop 64.0
    %s582 = vtos %v581
    %s583 = smul.f32 %s580, %s582
    %s584 = scalar_lea.smem [#allocation10], 0
    %585 = sst [smem:[%s584]] %s583
    // Predicated region
    $region42: #{transfer_net_forward.1} parent=1 // pred_check
      _
    $region43: #{transfer_net_forward.1} parent=1 // pred_check_branch
      %587 = sbr.rel (0) target = $region45
    $region44: #{transfer_net_forward.1} parent=1 // pred_region
      _
    $region45: #{transfer_net_forward.1} parent=1 // pred_fallthru
      _
    // Predicated region
    $region46: #{transfer_net_forward.1} parent=1 // pred_check
      _
    $region47: #{transfer_net_forward.1} parent=1 // pred_check_branch
      %589 = sbr.rel (0) target = $region49
    $region48: #{transfer_net_forward.1} parent=1 // pred_region
      _
    $region49: #{transfer_net_forward.1} parent=1 // pred_fallthru
      _
    // Predicated region
    $region50: #{transfer_net_forward.1} parent=1 // pred_check
      _
    $region51: #{transfer_net_forward.1} parent=1 // pred_check_branch
      %591 = sbr.rel (0) target = $region53
    $region52: #{transfer_net_forward.1} parent=1 // pred_region
      %s593 = ssub.s32 16, 16
      %594 = vsyncadd [#allocation4], %s593
      %597 = dma.smem_to_hbm [#allocation10], 16, %s8, [#allocation4]
    $region53: #{transfer_net_forward.1} parent=1 // pred_fallthru
      _
    // Predicated region
    $region54: #{transfer_net_forward.1} parent=1 // pred_check
      _
    $region55: #{transfer_net_forward.1} parent=1 // pred_check_branch
      %599 = sbr.rel (0) target = $region57
    $region56: #{transfer_net_forward.1} parent=1 // pred_region
      _
    $region57: #{transfer_net_forward.1} parent=1 // pred_fallthru
      _
    // Predicated region
    $region58: #{transfer_net_forward.1} parent=1 // pred_check
      _
    $region59: #{transfer_net_forward.1} parent=1 // pred_check_branch
      %601 = sbr.rel (0) target = $region61
    $region60: #{transfer_net_forward.1} parent=1 // pred_region
      _
    $region61: #{transfer_net_forward.1} parent=1 // pred_fallthru
      _
    // Predicated region
    $region62: #{transfer_net_forward.1} parent=1 // pred_check
      _
    $region63: #{transfer_net_forward.1} parent=1 // pred_check_branch
      %603 = sbr.rel (0) target = $region65
    $region64: #{transfer_net_forward.1} parent=1 // pred_region
      %604 = dma.done [#allocation4], 16
    $region65: #{transfer_net_forward.1} parent=1 // pred_fallthru
      _
    %605 = sfence
    %606 = vsyncpa [#allocation3], 1
    %607 = vsyncpa [#allocation6], 1
    %608 = vsyncpa [#allocation9], 1
    %609 = vsyncpa [#allocation4], 1

</llo_original>
